<compile_context>
chip_gen: v7x
topology: tpu7x:2x2x1
jax: 0.10.0
libtpu: 0.0.40
codegen_flags: <defaults>
</compile_context>

<pallas_src>
import functools

import jax
import jax.numpy as jnp
from jax.experimental import pallas as pl
from jax.experimental.pallas import tpu as pltpu


def _gcn_layer1_kernel(adj_ref, xs_ref, dis_ref, w1_ref, b1_ref, w2s_ref, zs_ref):
    """Per row tile:  zs = d * ( relu( d * (A @ (d*X)) @ W1 + b1 ) @ W2.sum(cols) ).

    adj_ref : [TM, N] bf16  raw 0/1 adjacency rows (streamed)
    xs_ref  : [N,  F] bf16  D^{-1/2} X            (resident)
    dis_ref : [TM, 1] f32   d_inv_sqrt for this row tile
    w1_ref  : [F,  H] f32,  b1_ref: [1, H] f32,  w2s_ref: [H, 1] f32 (= W2 @ 1_C)
    zs_ref  : [TM, 1] f32   output
    """
    ax = jnp.dot(adj_ref[...], xs_ref[...], preferred_element_type=jnp.float32)  # [TM, F]
    ax = ax * dis_ref[...]                                                       # row scale
    h = jnp.dot(ax, w1_ref[...], preferred_element_type=jnp.float32) + b1_ref[...]
    h = jnp.maximum(h, 0.0)                                                      # [TM, H]
    z = jnp.dot(h, w2s_ref[...], preferred_element_type=jnp.float32)             # [TM, 1]
    zs_ref[...] = dis_ref[...] * z


def _gcn_readout_kernel(adj_ref, zs_ref, dis_ref, b2s_ref, out_ref, *, inv_max_nodes):
    """Per row tile:  out = (d * (A @ zs) + b2.sum()) / max_nodes."""
    zs = zs_ref[...].astype(adj_ref.dtype)                                        # bf16 mat-vec
    az = jnp.dot(adj_ref[...], zs, preferred_element_type=jnp.float32)            # [TM, 1]
    out_ref[...] = (az * dis_ref[...] + b2s_ref[...]) * inv_max_nodes


def _pick_row_tile(n):
    """Largest row tile dividing N whose double-buffered bf16 adj block stays a few MiB."""
    for tm in (1024, 512, 256, 128, 64, 32, 16, 8):
        if n % tm == 0 and 2 * tm * n * 2 <= (24 << 20):
            return tm
    return n


def _vmem_budget(bytes_per_step):
    """Explicit scoped-VMEM budget: double-buffered pipeline + margin, below v7x's 64 MiB."""
    return int(min(max(2 * bytes_per_step + (4 << 20), 8 << 20), 56 << 20))


def dense_gcn_forward(adj, features, w1, b1, w2, b2):
    """adj [N,N]; features [N,F]; w1 [F,H]; b1 [H]; w2 [H,C]; b2 [C].

    Weights are passed already transposed to [in, out] (nn.Linear stores [out, in]).
    Returns out [N] == (conv2(conv1)).sum(dim=1) / max_nodes.
    """
    N = adj.shape[0]
    max_nodes = adj.shape[1]
    F = features.shape[1]
    H = w1.shape[1]

    adj_f32 = adj.astype(jnp.float32)

    # ---- normalization hoisted out of the kernels (single streaming pass, EUP rsqrt) ----
    deg = jnp.sum(adj_f32, axis=1, keepdims=True)                      # [N, 1]
    dis = jnp.where(deg > 0, jax.lax.rsqrt(deg), 0.0)                  # D^{-1/2}, inf -> 0

    # adj stays a raw 0/1 matrix (normalization folded into thin operands) -> bf16 is exact.
    adj_bf16 = adj_f32.astype(jnp.bfloat16)
    xs = (dis * features.astype(jnp.float32)).astype(jnp.bfloat16)     # D^{-1/2} X   [N, F]
    w1f = w1.astype(jnp.float32)
    b1f = b1.reshape(1, -1).astype(jnp.float32)
    # class-sum readout commutes through conv2's linear layer -> vector / scalar params
    w2sum = jnp.sum(w2.astype(jnp.float32), axis=1, keepdims=True)     # [H, 1]
    b2sum = jnp.sum(b2.astype(jnp.float32)).reshape(1, 1)              # [1, 1]

    tm = _pick_row_tile(N)
    grid = (N // tm,)

    # ---- kernel 1: zs = d * (relu(conv1) @ W2.sum(cols)) ----
    bytes1 = tm * N * 2 + N * F * 2 + tm * 4 + F * H * 4 + 2 * H * 4 + tm * 4
    zs = pl.pallas_call(
        _gcn_layer1_kernel,
        out_shape=jax.ShapeDtypeStruct((N, 1), jnp.float32),
        grid=grid,
        in_specs=[
            pl.BlockSpec((tm, N), lambda i: (i, 0)),   # adj rows (streamed, double-buffered)
            pl.BlockSpec((N, F), lambda i: (0, 0)),    # D^{-1/2} X (resident)
            pl.BlockSpec((tm, 1), lambda i: (i, 0)),   # d_inv_sqrt rows
            pl.BlockSpec((F, H), lambda i: (0, 0)),    # W1
            pl.BlockSpec((1, H), lambda i: (0, 0)),    # b1
            pl.BlockSpec((H, 1), lambda i: (0, 0)),    # W2 @ 1_C
        ],
        out_specs=pl.BlockSpec((tm, 1), lambda i: (i, 0)),
        compiler_params=pltpu.CompilerParams(
            dimension_semantics=("parallel",),          # shard row tiles across v7x TCs
            vmem_limit_bytes=_vmem_budget(bytes1),
        ),
    )(adj_bf16, xs, dis, w1f, b1f, w2sum)

    # ---- kernel 2: out = (d * (A @ zs) + b2.sum()) / max_nodes ----
    bytes2 = tm * N * 2 + N * 4 + tm * 4 + 4 + tm * 4
    out = pl.pallas_call(
        functools.partial(_gcn_readout_kernel, inv_max_nodes=1.0 / float(max_nodes)),
        out_shape=jax.ShapeDtypeStruct((N, 1), jnp.float32),
        grid=grid,
        in_specs=[
            pl.BlockSpec((tm, N), lambda i: (i, 0)),   # adj rows (streamed again)
            pl.BlockSpec((N, 1), lambda i: (0, 0)),    # zs (resident)
            pl.BlockSpec((tm, 1), lambda i: (i, 0)),   # d_inv_sqrt rows
            pl.BlockSpec((1, 1), lambda i: (0, 0)),    # b2.sum()
        ],
        out_specs=pl.BlockSpec((tm, 1), lambda i: (i, 0)),
        compiler_params=pltpu.CompilerParams(
            dimension_semantics=("parallel",),
            vmem_limit_bytes=_vmem_budget(bytes2),
        ),
    )(adj_bf16, zs, dis, b2sum)

    return out[:, 0]   # [N], matching torch's x.sum(dim=1) / max_nodes


def dense_gcn_reference(adj, features, w1, b1, w2, b2):
    deg = adj.sum(1)
    dis = jnp.power(deg, -0.5)
    dis = jnp.where(jnp.isinf(dis), 0.0, dis)
    adj_n = adj * dis[:, None] * dis[None, :]
    h = jnp.maximum(adj_n @ features @ w1 + b1, 0.0)
    y = adj_n @ h @ w2 + b2
    return y.sum(axis=1) / adj.shape[1]


if __name__ == "__main__":
    # Small shapes consistent with the module: N nodes, in_feats -> h_feats -> num_classes.
    N, in_feats, h_feats, num_classes = 128, 32, 32, 8

    key = jax.random.PRNGKey(0)
    k_adj, k_feat, k_w1, k_b1, k_w2, k_b2 = jax.random.split(key, 6)

    # Symmetric 0/1 adjacency with self-loops.
    a = (jax.random.uniform(k_adj, (N, N)) < 0.1).astype(jnp.float32)
    adj = jnp.minimum(jnp.maximum(a, a.T) + jnp.eye(N, dtype=jnp.float32), 1.0)

    features = jax.random.normal(k_feat, (N, in_feats), dtype=jnp.float32)

    # nn.Linear-style params, already transposed to [in, out].
    w1 = jax.random.normal(k_w1, (in_feats, h_feats), dtype=jnp.float32) * 0.1
    b1 = jax.random.normal(k_b1, (h_feats,), dtype=jnp.float32) * 0.1
    w2 = jax.random.normal(k_w2, (h_feats, num_classes), dtype=jnp.float32) * 0.1
    b2 = jax.random.normal(k_b2, (num_classes,), dtype=jnp.float32) * 0.1

    out = dense_gcn_forward(adj, features, w1, b1, w2, b2)
    out = jax.block_until_ready(out)

    ref = dense_gcn_reference(adj, features, w1, b1, w2, b2)
    assert out.shape == (N,)
    assert jnp.allclose(out, ref, rtol=5e-2, atol=5e-3), (
        f"mismatch vs JAX reference: max|diff|={float(jnp.max(jnp.abs(out - ref))):.3e}")

    print("KERNEL_OK")
</pallas_src>

<mosaic_0001>
module attributes {stable_mosaic.version = 11 : i64} {
  func.func @_gcn_layer1_kernel(%arg0: i32, %arg1: memref<128x128xbf16, #tpu.memory_space<vmem>>, %arg2: memref<128x32xbf16, #tpu.memory_space<vmem>>, %arg3: memref<128x1xf32, #tpu.memory_space<vmem>>, %arg4: memref<32x32xf32, #tpu.memory_space<vmem>>, %arg5: memref<1x32xf32, #tpu.memory_space<vmem>>, %arg6: memref<32x1xf32, #tpu.memory_space<vmem>>, %arg7: memref<128x1xf32, #tpu.memory_space<vmem>>) attributes {dimension_semantics = [#tpu.dimension_semantics<parallel>], iteration_bounds = array<i64: 1>, scalar_prefetch = 0 : i64, scratch_operands = 0 : i64, tpu.core_type = #tpu.core_type<tc>, window_params = [{transform_indices = @transform_0, window_bounds = array<i64: 128, 128>}, {pipeline_mode = #tpu.pipeline_mode<synchronous>, transform_indices = @transform_1, window_bounds = array<i64: 128, 32>}, {transform_indices = @transform_2, window_bounds = array<i64: 128, 1>}, {pipeline_mode = #tpu.pipeline_mode<synchronous>, transform_indices = @transform_3, window_bounds = array<i64: 32, 32>}, {pipeline_mode = #tpu.pipeline_mode<synchronous>, transform_indices = @transform_4, window_bounds = array<i64: 1, 32>}, {pipeline_mode = #tpu.pipeline_mode<synchronous>, transform_indices = @transform_5, window_bounds = array<i64: 32, 1>}, {transform_indices = @transform_6, window_bounds = array<i64: 128, 1>}]} {
    %c0 = arith.constant 0 : index
    %c0_0 = arith.constant 0 : index
    %0 = vector.load %arg1[%c0, %c0_0] : memref<128x128xbf16, #tpu.memory_space<vmem>>, vector<128x128xbf16>
    %c0_1 = arith.constant 0 : index
    %c0_2 = arith.constant 0 : index
    %1 = vector.load %arg2[%c0_1, %c0_2] : memref<128x32xbf16, #tpu.memory_space<vmem>>, vector<128x32xbf16>
    %cst = arith.constant dense<0.000000e+00> : vector<128x32xf32>
    %2 = tpu.matmul %0, %1, %cst {dimension_numbers = #tpu.dot_dimension_numbers<[1], [0], [0], [1], [0, 0, 1, 1], [], []>} : vector<128x128xbf16>, vector<128x32xbf16>, vector<128x32xf32> -> vector<128x32xf32>
    %c0_3 = arith.constant 0 : index
    %c0_4 = arith.constant 0 : index
    %3 = vector.load %arg3[%c0_3, %c0_4] : memref<128x1xf32, #tpu.memory_space<vmem>>, vector<128x1xf32>
    %4 = vector.broadcast %3 : vector<128x1xf32> to vector<128x32xf32>
    %5 = arith.mulf %2, %4 : vector<128x32xf32>
    %c0_5 = arith.constant 0 : index
    %c0_6 = arith.constant 0 : index
    %6 = vector.load %arg4[%c0_5, %c0_6] : memref<32x32xf32, #tpu.memory_space<vmem>>, vector<32x32xf32>
    %cst_7 = arith.constant dense<0.000000e+00> : vector<128x32xf32>
    %7 = tpu.matmul %5, %6, %cst_7 {dimension_numbers = #tpu.dot_dimension_numbers<[1], [0], [0], [1], [0, 0, 1, 1], [], []>} : vector<128x32xf32>, vector<32x32xf32>, vector<128x32xf32> -> vector<128x32xf32>
    %c0_8 = arith.constant 0 : index
    %c0_9 = arith.constant 0 : index
    %8 = vector.load %arg5[%c0_8, %c0_9] : memref<1x32xf32, #tpu.memory_space<vmem>>, vector<1x32xf32>
    %9 = vector.broadcast %8 : vector<1x32xf32> to vector<128x32xf32>
    %10 = arith.addf %7, %9 : vector<128x32xf32>
    %cst_10 = arith.constant 0.000000e+00 : f32
    %11 = vector.broadcast %cst_10 : f32 to vector<128x32xf32>
    %12 = arith.maximumf %10, %11 : vector<128x32xf32>
    %c0_11 = arith.constant 0 : index
    %c0_12 = arith.constant 0 : index
    %13 = vector.load %arg6[%c0_11, %c0_12] : memref<32x1xf32, #tpu.memory_space<vmem>>, vector<32x1xf32>
    %cst_13 = arith.constant dense<0.000000e+00> : vector<128x1xf32>
    %14 = tpu.matmul %12, %13, %cst_13 {dimension_numbers = #tpu.dot_dimension_numbers<[1], [0], [0], [1], [0, 0, 1, 1], [], []>} : vector<128x32xf32>, vector<32x1xf32>, vector<128x1xf32> -> vector<128x1xf32>
    %c0_14 = arith.constant 0 : index
    %c0_15 = arith.constant 0 : index
    %15 = vector.load %arg3[%c0_14, %c0_15] : memref<128x1xf32, #tpu.memory_space<vmem>>, vector<128x1xf32>
    %16 = arith.mulf %15, %14 : vector<128x1xf32>
    %c0_16 = arith.constant 0 : index
    %c0_17 = arith.constant 0 : index
    %17 = vector.load %arg7[%c0_16, %c0_17] : memref<128x1xf32, #tpu.memory_space<vmem>>, vector<128x1xf32>
    tpu.vector_store %arg7[%c0_16, %c0_17], %16 {strides = array<i32>} : memref<128x1xf32, #tpu.memory_space<vmem>>, vector<128x1xf32>,
    return
  }
  func.func @transform_0(%arg0: i32) -> (i32, i32) {
    %c0_i32 = arith.constant 0 : i32
    %c0_i32_0 = arith.constant 0 : i32
    return %arg0, %c0_i32 : i32, i32
  }
  func.func @transform_1(%arg0: i32) -> (i32, i32) {
    %c0_i32 = arith.constant 0 : i32
    %c0_i32_0 = arith.constant 0 : i32
    %c0_i32_1 = arith.constant 0 : i32
    return %c0_i32, %c0_i32_0 : i32, i32
  }
  func.func @transform_2(%arg0: i32) -> (i32, i32) {
    %c0_i32 = arith.constant 0 : i32
    %c0_i32_0 = arith.constant 0 : i32
    return %arg0, %c0_i32 : i32, i32
  }
  func.func @transform_3(%arg0: i32) -> (i32, i32) {
    %c0_i32 = arith.constant 0 : i32
    %c0_i32_0 = arith.constant 0 : i32
    %c0_i32_1 = arith.constant 0 : i32
    return %c0_i32, %c0_i32_0 : i32, i32
  }
  func.func @transform_4(%arg0: i32) -> (i32, i32) {
    %c0_i32 = arith.constant 0 : i32
    %c0_i32_0 = arith.constant 0 : i32
    %c0_i32_1 = arith.constant 0 : i32
    return %c0_i32, %c0_i32_0 : i32, i32
  }
  func.func @transform_5(%arg0: i32) -> (i32, i32) {
    %c0_i32 = arith.constant 0 : i32
    %c0_i32_0 = arith.constant 0 : i32
    %c0_i32_1 = arith.constant 0 : i32
    return %c0_i32, %c0_i32_0 : i32, i32
  }
  func.func @transform_6(%arg0: i32) -> (i32, i32) {
    %c0_i32 = arith.constant 0 : i32
    %c0_i32_0 = arith.constant 0 : i32
    return %arg0, %c0_i32 : i32, i32
  }
}

</mosaic_0001>

<llo_original>
// kernel: tpu_custom_call.1
$region0: #{tpu_custom_call.1}
  #allocation0 [shape = 'u32[]', space=smem, size = 0x4, offset = 0x4, fixed_abs, tag = 'smem constant byte address 0x4 - core index']
  #allocation1 [shape = 'u32[144,128]{1,0:T(1,128)}', space=vmem, size = 0x12000, scoped, tag = 'internal scratch']
  %s0 = inlined_call_operand.vmem [shape: bf16[128,128], index: 0, kind: input, shape index: {}]
  %s1 = inlined_call_operand.vmem [shape: bf16[128,32], index: 1, kind: input, shape index: {}]
  %s2 = inlined_call_operand.vmem [shape: f32[128,1], index: 2, kind: input, shape index: {}]
  %s3 = inlined_call_operand.vmem [shape: f32[32,32], index: 3, kind: input, shape index: {}]
  %s4 = inlined_call_operand.vmem [shape: f32[1,32], index: 4, kind: input, shape index: {}]
  %s5 = inlined_call_operand.vmem [shape: f32[32,1], index: 5, kind: input, shape index: {}]
  %s6 = inlined_call_operand.vmem [shape: f32[128,1], index: 6, kind: output, shape index: {}]
  %s7 = sld [smem:[#allocation0]]
  $region34: #{tpu_custom_call.1} parent=0
    _
  %s9 = ssub.s32 1, %s7
  %s10 = scalar_select 0, %s9, %s7
  // Predicated region
  $region2: #{tpu_custom_call.1} parent=0 // pred_check
    _
  $region3: #{tpu_custom_call.1} parent=0 // pred_check_branch
    %12 = sbr.rel (0) target = $region5
  $region4: #{tpu_custom_call.1} parent=0 // pred_region
    _
  $region5: #{tpu_custom_call.1} parent=0 // pred_fallthru
    _
  // Predicated region
  $region6: #{tpu_custom_call.1} parent=0 // pred_check
    _
  $region7: #{tpu_custom_call.1} parent=0 // pred_check_branch
    %14 = sbr.rel (0) target = $region9
  $region8: #{tpu_custom_call.1} parent=0 // pred_region
    _
  $region9: #{tpu_custom_call.1} parent=0 // pred_fallthru
    _
  // Predicated region
  $region10: #{tpu_custom_call.1} parent=0 // pred_check
    _
  $region11: #{tpu_custom_call.1} parent=0 // pred_check_branch
    %16 = sbr.rel (0) target = $region13
  $region12: #{tpu_custom_call.1} parent=0 // pred_region
    _
  $region13: #{tpu_custom_call.1} parent=0 // pred_fallthru
    _
  // Predicated region
  $region14: #{tpu_custom_call.1} parent=0 // pred_check
    _
  $region15: #{tpu_custom_call.1} parent=0 // pred_check_branch
    %18 = sbr.rel (0) target = $region17
  $region16: #{tpu_custom_call.1} parent=0 // pred_region
    _
  $region17: #{tpu_custom_call.1} parent=0 // pred_fallthru
    _
  // Predicated region
  $region18: #{tpu_custom_call.1} parent=0 // pred_check
    _
  $region19: #{tpu_custom_call.1} parent=0 // pred_check_branch
    %20 = sbr.rel (0) target = $region21
  $region20: #{tpu_custom_call.1} parent=0 // pred_region
    _
  $region21: #{tpu_custom_call.1} parent=0 // pred_fallthru
    _
  // Predicated region
  $region22: #{tpu_custom_call.1} parent=0 // pred_check
    _
  $region23: #{tpu_custom_call.1} parent=0 // pred_check_branch
    %22 = sbr.rel (0) target = $region25
  $region24: #{tpu_custom_call.1} parent=0 // pred_region
    _
  $region25: #{tpu_custom_call.1} parent=0 // pred_fallthru
    _
  %v24 = vld [vmem:[%s0] sm:$0xf]
  %v25 = vld [vmem:[%s0 + $0x4] sm:$0xf]
  %v26 = vld [vmem:[%s0 + $0x8] sm:$0xf]
  %v27 = vld [vmem:[%s0 + $0xc] sm:$0xf]
  %v28 = vld [vmem:[%s0 + $0x10] sm:$0xf]
  %v29 = vld [vmem:[%s0 + $0x14] sm:$0xf]
  %v30 = vld [vmem:[%s0 + $0x18] sm:$0xf]
  %v31 = vld [vmem:[%s0 + $0x1c] sm:$0xf]
  %v32 = vld [vmem:[%s0 + $0x20] sm:$0xf]
  %v33 = vld [vmem:[%s0 + $0x24] sm:$0xf]
  %v34 = vld [vmem:[%s0 + $0x28] sm:$0xf]
  %v35 = vld [vmem:[%s0 + $0x2c] sm:$0xf]
  %v36 = vld [vmem:[%s0 + $0x30] sm:$0xf]
  %v37 = vld [vmem:[%s0 + $0x34] sm:$0xf]
  %v38 = vld [vmem:[%s0 + $0x38] sm:$0xf]
  %v39 = vld [vmem:[%s0 + $0x3c] sm:$0xf]
  %v40 = vld [vmem:[%s1] sm:$0xf]
  %v41 = vld [vmem:[%s1 + $0x4] sm:$0xf]
  %v42 = vld [vmem:[%s1 + $0x8] sm:$0xf]
  %v43 = vld [vmem:[%s1 + $0xc] sm:$0xf]
  %v44 = vld [vmem:[%s1 + $0x10] sm:$0xf]
  %v45 = vld [vmem:[%s1 + $0x14] sm:$0xf]
  %v46 = vld [vmem:[%s1 + $0x18] sm:$0xf]
  %v47 = vld [vmem:[%s1 + $0x1c] sm:$0xf]
  %v48 = vld [vmem:[%s1 + $0x20] sm:$0xf]
  %v49 = vld [vmem:[%s1 + $0x24] sm:$0xf]
  %v50 = vld [vmem:[%s1 + $0x28] sm:$0xf]
  %v51 = vld [vmem:[%s1 + $0x2c] sm:$0xf]
  %v52 = vld [vmem:[%s1 + $0x30] sm:$0xf]
  %v53 = vld [vmem:[%s1 + $0x34] sm:$0xf]
  %v54 = vld [vmem:[%s1 + $0x38] sm:$0xf]
  %v55 = vld [vmem:[%s1 + $0x3c] sm:$0xf]
  %v72 = vunpack.c.l.b16 %v24
  %v73 = vunpack.c.l.b16 %v25
  %v74 = vunpack.c.l.b16 %v26
  %v75 = vunpack.c.l.b16 %v27
  %v76 = vunpack.c.l.b16 %v28
  %v77 = vunpack.c.l.b16 %v29
  %v78 = vunpack.c.l.b16 %v30
  %v79 = vunpack.c.l.b16 %v31
  %v80 = vunpack.c.l.b16 %v32
  %v81 = vunpack.c.l.b16 %v33
  %v82 = vunpack.c.l.b16 %v34
  %v83 = vunpack.c.l.b16 %v35
  %v84 = vunpack.c.l.b16 %v36
  %v85 = vunpack.c.l.b16 %v37
  %v86 = vunpack.c.l.b16 %v38
  %v87 = vunpack.c.l.b16 %v39
  %v88 = vpack.c.b16 %v73, %v72
  %v89 = vpack.c.b16 %v75, %v74
  %v90 = vpack.c.b16 %v77, %v76
  %v91 = vpack.c.b16 %v79, %v78
  %v92 = vpack.c.b16 %v81, %v80
  %v93 = vpack.c.b16 %v83, %v82
  %v94 = vpack.c.b16 %v85, %v84
  %v95 = vpack.c.b16 %v87, %v86
  %v120 = vunpack.c.l.b16 %v40
  %v121 = vunpack.c.l.b16 %v41
  %v122 = vunpack.c.l.b16 %v42
  %v123 = vunpack.c.l.b16 %v43
  %v124 = vunpack.c.l.b16 %v44
  %v125 = vunpack.c.l.b16 %v45
  %v126 = vunpack.c.l.b16 %v46
  %v127 = vunpack.c.l.b16 %v47
  %v128 = vunpack.c.l.b16 %v48
  %v129 = vunpack.c.l.b16 %v49
  %v130 = vunpack.c.l.b16 %v50
  %v131 = vunpack.c.l.b16 %v51
  %v132 = vunpack.c.l.b16 %v52
  %v133 = vunpack.c.l.b16 %v53
  %v134 = vunpack.c.l.b16 %v54
  %v135 = vunpack.c.l.b16 %v55
  %v136 = vpack.c.b16 %v121, %v120
  %v137 = vpack.c.b16 %v123, %v122
  %v138 = vpack.c.b16 %v125, %v124
  %v139 = vpack.c.b16 %v127, %v126
  %v140 = vpack.c.b16 %v129, %v128
  %v141 = vpack.c.b16 %v131, %v130
  %v142 = vpack.c.b16 %v133, %v132
  %v143 = vpack.c.b16 %v135, %v134
  %152 = vmatprep.subr.bf16.mxu0 0
  %153 = vmatpush1.bf16.msra.mxu0 %v136
  %154 = vmatprep.subr.bf16.mxu0 0
  %155 = vmatpush1.bf16.msra.mxu0 %v137
  %156 = vmatprep.subr.bf16.mxu0 0
  %157 = vmatpush1.bf16.msra.mxu0 %v138
  %158 = vmatprep.subr.bf16.mxu0 0
  %159 = vmatpush1.bf16.msra.mxu0 %v139
  %160 = vmatprep.subr.bf16.mxu0 0
  %161 = vmatpush1.bf16.msra.mxu0 %v140
  %162 = vmatprep.subr.bf16.mxu0 0
  %163 = vmatpush1.bf16.msra.mxu0 %v141
  %164 = vmatprep.subr.bf16.mxu0 0
  %165 = vmatpush1.bf16.msra.mxu0 %v142
  %166 = vmatprep.subr.bf16.mxu0 0
  %167 = vmatpush1.bf16.msra.mxu0 %v143
  %168 = vmatprep.subr.bf16.mxu0 0
  %169 = vmatpush1.bf16.msra.mxu0 0
  %170 = vmatprep.subr.bf16.mxu0 0
  %171 = vmatpush1.bf16.msra.mxu0 0
  %172 = vmatprep.subr.bf16.mxu0 0
  %173 = vmatpush1.bf16.msra.mxu0 0
  %174 = vmatprep.subr.bf16.mxu0 0
  %175 = vmatpush1.bf16.msra.mxu0 0
  %176 = vmatprep.subr.bf16.mxu0 0
  %177 = vmatpush1.bf16.msra.mxu0 0
  %178 = vmatprep.subr.bf16.mxu0 0
  %179 = vmatpush1.bf16.msra.mxu0 0
  %180 = vmatprep.subr.bf16.mxu0 0
  %181 = vmatpush1.bf16.msra.mxu0 0
  %182 = vmatprep.subr.bf16.mxu0 0
  %183 = vmatpush1.bf16.msra.mxu0 0
  %184 = vmatprep.mubr.bf16.mxu0 0
  %185 = vmatmul.mubr.bf16.gmra.mrb[0].mxu0 %v88
  %v186 = vpop.f32.mrb[0].mxu0
  %v187 = vadd.f32 0.0, %v186
  %v188 = vpop.f32.mrb[0].mxu0
  %v189 = vpop.f32.mrb[0].mxu0
  %v190 = vadd.f32 0.0, %v189
  %v191 = vpop.f32.mrb[0].mxu0
  %192 = vmatprep.mubr.bf16.mxu0 0
  %193 = vmatmul.mubr.bf16.gmra.mrb[0].mxu0 %v89
  %v194 = vpop.f32.mrb[0].mxu0
  %v195 = vadd.f32 0.0, %v194
  %v196 = vpop.f32.mrb[0].mxu0
  %v197 = vpop.f32.mrb[0].mxu0
  %v198 = vadd.f32 0.0, %v197
  %v199 = vpop.f32.mrb[0].mxu0
  %200 = vmatprep.mubr.bf16.mxu0 0
  %201 = vmatmul.mubr.bf16.gmra.mrb[0].mxu0 %v90
  %v202 = vpop.f32.mrb[0].mxu0
  %v203 = vadd.f32 0.0, %v202
  %v204 = vpop.f32.mrb[0].mxu0
  %v205 = vpop.f32.mrb[0].mxu0
  %v206 = vadd.f32 0.0, %v205
  %v207 = vpop.f32.mrb[0].mxu0
  %208 = vmatprep.mubr.bf16.mxu0 0
  %209 = vmatmul.mubr.bf16.gmra.mrb[0].mxu0 %v91
  %v210 = vpop.f32.mrb[0].mxu0
  %v211 = vadd.f32 0.0, %v210
  %v212 = vpop.f32.mrb[0].mxu0
  %v213 = vpop.f32.mrb[0].mxu0
  %v214 = vadd.f32 0.0, %v213
  %v215 = vpop.f32.mrb[0].mxu0
  %216 = vmatprep.mubr.bf16.mxu0 0
  %217 = vmatmul.mubr.bf16.gmra.mrb[0].mxu0 %v92
  %v218 = vpop.f32.mrb[0].mxu0
  %v219 = vadd.f32 0.0, %v218
  %v220 = vpop.f32.mrb[0].mxu0
  %v221 = vpop.f32.mrb[0].mxu0
  %v222 = vadd.f32 0.0, %v221
  %v223 = vpop.f32.mrb[0].mxu0
  %224 = vmatprep.mubr.bf16.mxu0 0
  %225 = vmatmul.mubr.bf16.gmra.mrb[0].mxu0 %v93
  %v226 = vpop.f32.mrb[0].mxu0
  %v227 = vadd.f32 0.0, %v226
  %v228 = vpop.f32.mrb[0].mxu0
  %v229 = vpop.f32.mrb[0].mxu0
  %v230 = vadd.f32 0.0, %v229
  %v231 = vpop.f32.mrb[0].mxu0
  %232 = vmatprep.mubr.bf16.mxu0 0
  %233 = vmatmul.mubr.bf16.gmra.mrb[0].mxu0 %v94
  %v234 = vpop.f32.mrb[0].mxu0
  %v235 = vadd.f32 0.0, %v234
  %v236 = vpop.f32.mrb[0].mxu0
  %v237 = vpop.f32.mrb[0].mxu0
  %v238 = vadd.f32 0.0, %v237
  %v239 = vpop.f32.mrb[0].mxu0
  %240 = vmatprep.mubr.bf16.mxu0 0
  %241 = vmatmul.mubr.bf16.gmra.mrb[0].mxu0 %v95
  %v242 = vpop.f32.mrb[0].mxu0
  %v243 = vadd.f32 0.0, %v242
  %v244 = vpop.f32.mrb[0].mxu0
  %v245 = vpop.f32.mrb[0].mxu0
  %v246 = vadd.f32 0.0, %v245
  %v247 = vpop.f32.mrb[0].mxu0
  %248 = vdwg.mxu0
  %v249 = vld [vmem:[%s2] sm:$0xff]
  %v250 = vld [vmem:[%s2 + $0x8] sm:$0xff]
  %v251 = vld [vmem:[%s2 + $0x10] sm:$0xff]
  %v252 = vld [vmem:[%s2 + $0x18] sm:$0xff]
  %v253 = vld [vmem:[%s2 + $0x20] sm:$0xff]
  %v254 = vld [vmem:[%s2 + $0x28] sm:$0xff]
  %v255 = vld [vmem:[%s2 + $0x30] sm:$0xff]
  %v256 = vld [vmem:[%s2 + $0x38] sm:$0xff]
  %v257 = vld [vmem:[%s2 + $0x40] sm:$0xff]
  %v258 = vld [vmem:[%s2 + $0x48] sm:$0xff]
  %v259 = vld [vmem:[%s2 + $0x50] sm:$0xff]
  %v260 = vld [vmem:[%s2 + $0x58] sm:$0xff]
  %v261 = vld [vmem:[%s2 + $0x60] sm:$0xff]
  %v262 = vld [vmem:[%s2 + $0x68] sm:$0xff]
  %v263 = vld [vmem:[%s2 + $0x70] sm:$0xff]
  %v264 = vld [vmem:[%s2 + $0x78] sm:$0xff]
  %266 = vset.pattern.permute.xlu0 0
  %267 = vperm.xlu0 %266, %v249
  %v268 = vpop.permute.xlu0 %267
  %271 = vset.pattern.permute.xlu0 0
  %272 = vperm.xlu0 %271, %v250
  %v273 = vpop.permute.xlu0 %272
  %276 = vset.pattern.permute.xlu0 0
  %277 = vperm.xlu0 %276, %v251
  %v278 = vpop.permute.xlu0 %277
  %281 = vset.pattern.permute.xlu0 0
  %282 = vperm.xlu0 %281, %v252
  %v283 = vpop.permute.xlu0 %282
  %286 = vset.pattern.permute.xlu0 0
  %287 = vperm.xlu0 %286, %v253
  %v288 = vpop.permute.xlu0 %287
  %291 = vset.pattern.permute.xlu0 0
  %292 = vperm.xlu0 %291, %v254
  %v293 = vpop.permute.xlu0 %292
  %296 = vset.pattern.permute.xlu0 0
  %297 = vperm.xlu0 %296, %v255
  %v298 = vpop.permute.xlu0 %297
  %301 = vset.pattern.permute.xlu0 0
  %302 = vperm.xlu0 %301, %v256
  %v303 = vpop.permute.xlu0 %302
  %306 = vset.pattern.permute.xlu0 0
  %307 = vperm.xlu0 %306, %v257
  %v308 = vpop.permute.xlu0 %307
  %311 = vset.pattern.permute.xlu0 0
  %312 = vperm.xlu0 %311, %v258
  %v313 = vpop.permute.xlu0 %312
  %316 = vset.pattern.permute.xlu0 0
  %317 = vperm.xlu0 %316, %v259
  %v318 = vpop.permute.xlu0 %317
  %321 = vset.pattern.permute.xlu0 0
  %322 = vperm.xlu0 %321, %v260
  %v323 = vpop.permute.xlu0 %322
  %326 = vset.pattern.permute.xlu0 0
  %327 = vperm.xlu0 %326, %v261
  %v328 = vpop.permute.xlu0 %327
  %331 = vset.pattern.permute.xlu0 0
  %332 = vperm.xlu0 %331, %v262
  %v333 = vpop.permute.xlu0 %332
  %336 = vset.pattern.permute.xlu0 0
  %337 = vperm.xlu0 %336, %v263
  %v338 = vpop.permute.xlu0 %337
  %341 = vset.pattern.permute.xlu0 0
  %342 = vperm.xlu0 %341, %v264
  %v343 = vpop.permute.xlu0 %342
  %v345 = vmul.f32 %v187, %v268
  %v346 = vmul.f32 %v190, %v273
  %v347 = vmul.f32 %v195, %v278
  %v348 = vmul.f32 %v198, %v283
  %v349 = vmul.f32 %v203, %v288
  %v350 = vmul.f32 %v206, %v293
  %v351 = vmul.f32 %v211, %v298
  %v352 = vmul.f32 %v214, %v303
  %v353 = vmul.f32 %v219, %v308
  %v354 = vmul.f32 %v222, %v313
  %v355 = vmul.f32 %v227, %v318
  %v356 = vmul.f32 %v230, %v323
  %v357 = vmul.f32 %v235, %v328
  %v358 = vmul.f32 %v238, %v333
  %v359 = vmul.f32 %v243, %v338
  %v360 = vmul.f32 %v246, %v343
  %v361 = vld [vmem:[%s3] sm:$0xff]
  %v362 = vld [vmem:[%s3 + $0x8] sm:$0xff]
  %v363 = vld [vmem:[%s3 + $0x10] sm:$0xff]
  %v364 = vld [vmem:[%s3 + $0x18] sm:$0xff]
  %v365 = vld [vmem:[%s4] sm:$0x1]
  %v367 = vlaneseq
  %v368 = vshrl.u32 %v367, 7
  %v369 = vsub.s32 0, %v368
  %v370 = vrot.slane %v365, %v369
  %vm372 = vcmask 261120
  %v374 = vsel %vm372, %v345, 0
  %v377 = vsel %vm372, %v346, 0
  %v380 = vsel %vm372, %v347, 0
  %v383 = vsel %vm372, %v348, 0
  %v386 = vsel %vm372, %v349, 0
  %v389 = vsel %vm372, %v350, 0
  %v392 = vsel %vm372, %v351, 0
  %v395 = vsel %vm372, %v352, 0
  %v398 = vsel %vm372, %v353, 0
  %v401 = vsel %vm372, %v354, 0
  %v404 = vsel %vm372, %v355, 0
  %v407 = vsel %vm372, %v356, 0
  %v410 = vsel %vm372, %v357, 0
  %v413 = vsel %vm372, %v358, 0
  %v416 = vsel %vm372, %v359, 0
  %v419 = vsel %vm372, %v360, 0
  %421 = vmatprep.subr.mxu0 0.0
  %422 = vmatpush1.msra.mxu0 %v361
  %423 = vmatprep.subr.mxu0 0.0
  %424 = vmatpush1.msra.mxu0 %v362
  %425 = vmatprep.subr.mxu0 0.0
  %426 = vmatpush1.msra.mxu0 %v363
  %427 = vmatprep.subr.mxu0 0.0
  %428 = vmatpush1.msra.mxu0 %v364
  %429 = vmatprep.subr.mxu0 0.0
  %430 = vmatpush1.msra.mxu0 0.0
  %431 = vmatprep.subr.mxu0 0.0
  %432 = vmatpush1.msra.mxu0 0.0
  %433 = vmatprep.subr.mxu0 0.0
  %434 = vmatpush1.msra.mxu0 0.0
  %435 = vmatprep.subr.mxu0 0.0
  %436 = vmatpush1.msra.mxu0 0.0
  %437 = vmatprep.subr.mxu0 0.0
  %438 = vmatpush1.msra.mxu0 0.0
  %439 = vmatprep.subr.mxu0 0.0
  %440 = vmatpush1.msra.mxu0 0.0
  %441 = vmatprep.subr.mxu0 0.0
  %442 = vmatpush1.msra.mxu0 0.0
  %443 = vmatprep.subr.mxu0 0.0
  %444 = vmatpush1.msra.mxu0 0.0
  %445 = vmatprep.subr.mxu0 0.0
  %446 = vmatpush1.msra.mxu0 0.0
  %447 = vmatprep.subr.mxu0 0.0
  %448 = vmatpush1.msra.mxu0 0.0
  %449 = vmatprep.subr.mxu0 0.0
  %450 = vmatpush1.msra.mxu0 0.0
  %451 = vmatprep.subr.mxu0 0.0
  %452 = vmatpush1.msra.mxu0 0.0
  %453 = vmatprep.subr.mxu0 0.0
  %454 = vmatpush1.msra.mxu0 0.0
  %455 = vmatprep.subr.mxu0 0.0
  %456 = vmatpush1.msra.mxu0 0.0
  %457 = vmatprep.subr.mxu0 0.0
  %458 = vmatpush1.msra.mxu0 0.0
  %459 = vmatprep.subr.mxu0 0.0
  %460 = vmatpush1.msra.mxu0 0.0
  %461 = vmatprep.subr.mxu0 0.0
  %462 = vmatpush1.msra.mxu0 0.0
  %463 = vmatprep.subr.mxu0 0.0
  %464 = vmatpush1.msra.mxu0 0.0
  %465 = vmatprep.subr.mxu0 0.0
  %466 = vmatpush1.msra.mxu0 0.0
  %467 = vmatprep.subr.mxu0 0.0
  %468 = vmatpush1.msra.mxu0 0.0
  %469 = vmatprep.subr.mxu0 0.0
  %470 = vmatpush1.msra.mxu0 0.0
  %471 = vmatprep.subr.mxu0 0.0
  %472 = vmatpush1.msra.mxu0 0.0
  %473 = vmatprep.subr.mxu0 0.0
  %474 = vmatpush1.msra.mxu0 0.0
  %475 = vmatprep.subr.mxu0 0.0
  %476 = vmatpush1.msra.mxu0 0.0
  %477 = vmatprep.subr.mxu0 0.0
  %478 = vmatpush1.msra.mxu0 0.0
  %479 = vmatprep.subr.mxu0 0.0
  %480 = vmatpush1.msra.mxu0 0.0
  %481 = vmatprep.subr.mxu0 0.0
  %482 = vmatpush1.msra.mxu0 0.0
  %483 = vmatprep.subr.mxu0 0.0
  %484 = vmatpush1.msra.mxu0 0.0
  %485 = vmatprep.mubr.f32.mxu0 0.0
  %486 = vmatmul.mubr.f32.gmra.mrb[0].mxu0 %v374
  %v487 = vpop.f32.mrb[0].mxu0
  %v488 = vadd.f32 %v370, %v487
  %v489 = vpop.f32.mrb[0].mxu0
  %490 = vmatprep.mubr.f32.mxu0 0.0
  %491 = vmatmul.mubr.f32.gmra.mrb[0].mxu0 %v377
  %v492 = vpop.f32.mrb[0].mxu0
  %v493 = vadd.f32 %v370, %v492
  %v494 = vpop.f32.mrb[0].mxu0
  %495 = vmatprep.mubr.f32.mxu0 0.0
  %496 = vmatmul.mubr.f32.gmra.mrb[0].mxu0 %v380
  %v497 = vpop.f32.mrb[0].mxu0
  %v498 = vadd.f32 %v370, %v497
  %v499 = vpop.f32.mrb[0].mxu0
  %500 = vmatprep.mubr.f32.mxu0 0.0
  %501 = vmatmul.mubr.f32.gmra.mrb[0].mxu0 %v383
  %v502 = vpop.f32.mrb[0].mxu0
  %v503 = vadd.f32 %v370, %v502
  %v504 = vpop.f32.mrb[0].mxu0
  %505 = vmatprep.mubr.f32.mxu0 0.0
  %506 = vmatmul.mubr.f32.gmra.mrb[0].mxu0 %v386
  %v507 = vpop.f32.mrb[0].mxu0
  %v508 = vadd.f32 %v370, %v507
  %v509 = vpop.f32.mrb[0].mxu0
  %510 = vmatprep.mubr.f32.mxu0 0.0
  %511 = vmatmul.mubr.f32.gmra.mrb[0].mxu0 %v389
  %v512 = vpop.f32.mrb[0].mxu0
  %v513 = vadd.f32 %v370, %v512
  %v514 = vpop.f32.mrb[0].mxu0
  %515 = vmatprep.mubr.f32.mxu0 0.0
  %516 = vmatmul.mubr.f32.gmra.mrb[0].mxu0 %v392
  %v517 = vpop.f32.mrb[0].mxu0
  %v518 = vadd.f32 %v370, %v517
  %v519 = vpop.f32.mrb[0].mxu0
  %520 = vmatprep.mubr.f32.mxu0 0.0
  %521 = vmatmul.mubr.f32.gmra.mrb[0].mxu0 %v395
  %v522 = vpop.f32.mrb[0].mxu0
  %v523 = vadd.f32 %v370, %v522
  %v524 = vpop.f32.mrb[0].mxu0
  %525 = vmatprep.mubr.f32.mxu0 0.0
  %526 = vmatmul.mubr.f32.gmra.mrb[0].mxu0 %v398
  %v527 = vpop.f32.mrb[0].mxu0
  %v528 = vadd.f32 %v370, %v527
  %v529 = vpop.f32.mrb[0].mxu0
  %530 = vmatprep.mubr.f32.mxu0 0.0
  %531 = vmatmul.mubr.f32.gmra.mrb[0].mxu0 %v401
  %v532 = vpop.f32.mrb[0].mxu0
  %v533 = vadd.f32 %v370, %v532
  %v534 = vpop.f32.mrb[0].mxu0
  %535 = vmatprep.mubr.f32.mxu0 0.0
  %536 = vmatmul.mubr.f32.gmra.mrb[0].mxu0 %v404
  %v537 = vpop.f32.mrb[0].mxu0
  %v538 = vadd.f32 %v370, %v537
  %v539 = vpop.f32.mrb[0].mxu0
  %540 = vmatprep.mubr.f32.mxu0 0.0
  %541 = vmatmul.mubr.f32.gmra.mrb[0].mxu0 %v407
  %v542 = vpop.f32.mrb[0].mxu0
  %v543 = vadd.f32 %v370, %v542
  %v544 = vpop.f32.mrb[0].mxu0
  %545 = vmatprep.mubr.f32.mxu0 0.0
  %546 = vmatmul.mubr.f32.gmra.mrb[0].mxu0 %v410
  %v547 = vpop.f32.mrb[0].mxu0
  %v548 = vadd.f32 %v370, %v547
  %v549 = vpop.f32.mrb[0].mxu0
  %550 = vmatprep.mubr.f32.mxu0 0.0
  %551 = vmatmul.mubr.f32.gmra.mrb[0].mxu0 %v413
  %v552 = vpop.f32.mrb[0].mxu0
  %v553 = vadd.f32 %v370, %v552
  %v554 = vpop.f32.mrb[0].mxu0
  %555 = vmatprep.mubr.f32.mxu0 0.0
  %556 = vmatmul.mubr.f32.gmra.mrb[0].mxu0 %v416
  %v557 = vpop.f32.mrb[0].mxu0
  %v558 = vadd.f32 %v370, %v557
  %v559 = vpop.f32.mrb[0].mxu0
  %560 = vmatprep.mubr.f32.mxu0 0.0
  %561 = vmatmul.mubr.f32.gmra.mrb[0].mxu0 %v419
  %v562 = vpop.f32.mrb[0].mxu0
  %v563 = vadd.f32 %v370, %v562
  %v564 = vpop.f32.mrb[0].mxu0
  %565 = vdwg.mxu0
  %v566 = vmax.f32 %v488, 0.0
  %v567 = vmax.f32 %v493, 0.0
  %v568 = vmax.f32 %v498, 0.0
  %v569 = vmax.f32 %v503, 0.0
  %v570 = vmax.f32 %v508, 0.0
  %v571 = vmax.f32 %v513, 0.0
  %v572 = vmax.f32 %v518, 0.0
  %v573 = vmax.f32 %v523, 0.0
  %v574 = vmax.f32 %v528, 0.0
  %v575 = vmax.f32 %v533, 0.0
  %v576 = vmax.f32 %v538, 0.0
  %v577 = vmax.f32 %v543, 0.0
  %v578 = vmax.f32 %v548, 0.0
  %v579 = vmax.f32 %v553, 0.0
  %v580 = vmax.f32 %v558, 0.0
  %v581 = vmax.f32 %v563, 0.0
  %v582 = vld [vmem:[%s5] sm:$0xff]
  %v583 = vld [vmem:[%s5 + $0x8] sm:$0xff]
  %v584 = vld [vmem:[%s5 + $0x10] sm:$0xff]
  %v585 = vld [vmem:[%s5 + $0x18] sm:$0xff]
  %v587 = vsel %vm372, %v566, 0
  %v590 = vsel %vm372, %v567, 0
  %v593 = vsel %vm372, %v568, 0
  %v596 = vsel %vm372, %v569, 0
  %v599 = vsel %vm372, %v570, 0
  %v602 = vsel %vm372, %v571, 0
  %v605 = vsel %vm372, %v572, 0
  %v608 = vsel %vm372, %v573, 0
  %v611 = vsel %vm372, %v574, 0
  %v614 = vsel %vm372, %v575, 0
  %v617 = vsel %vm372, %v576, 0
  %v620 = vsel %vm372, %v577, 0
  %v623 = vsel %vm372, %v578, 0
  %v626 = vsel %vm372, %v579, 0
  %v629 = vsel %vm372, %v580, 0
  %v632 = vsel %vm372, %v581, 0
  %634 = vmatprep.subr.mxu0 0.0
  %635 = vmatpush1.msra.mxu0 %v582
  %636 = vmatprep.subr.mxu0 0.0
  %637 = vmatpush1.msra.mxu0 %v583
  %638 = vmatprep.subr.mxu0 0.0
  %639 = vmatpush1.msra.mxu0 %v584
  %640 = vmatprep.subr.mxu0 0.0
  %641 = vmatpush1.msra.mxu0 %v585
  %642 = vmatprep.subr.mxu0 0.0
  %643 = vmatpush1.msra.mxu0 0.0
  %644 = vmatprep.subr.mxu0 0.0
  %645 = vmatpush1.msra.mxu0 0.0
  %646 = vmatprep.subr.mxu0 0.0
  %647 = vmatpush1.msra.mxu0 0.0
  %648 = vmatprep.subr.mxu0 0.0
  %649 = vmatpush1.msra.mxu0 0.0
  %650 = vmatprep.subr.mxu0 0.0
  %651 = vmatpush1.msra.mxu0 0.0
  %652 = vmatprep.subr.mxu0 0.0
  %653 = vmatpush1.msra.mxu0 0.0
  %654 = vmatprep.subr.mxu0 0.0
  %655 = vmatpush1.msra.mxu0 0.0
  %656 = vmatprep.subr.mxu0 0.0
  %657 = vmatpush1.msra.mxu0 0.0
  %658 = vmatprep.subr.mxu0 0.0
  %659 = vmatpush1.msra.mxu0 0.0
  %660 = vmatprep.subr.mxu0 0.0
  %661 = vmatpush1.msra.mxu0 0.0
  %662 = vmatprep.subr.mxu0 0.0
  %663 = vmatpush1.msra.mxu0 0.0
  %664 = vmatprep.subr.mxu0 0.0
  %665 = vmatpush1.msra.mxu0 0.0
  %666 = vmatprep.subr.mxu0 0.0
  %667 = vmatpush1.msra.mxu0 0.0
  %668 = vmatprep.subr.mxu0 0.0
  %669 = vmatpush1.msra.mxu0 0.0
  %670 = vmatprep.subr.mxu0 0.0
  %671 = vmatpush1.msra.mxu0 0.0
  %672 = vmatprep.subr.mxu0 0.0
  %673 = vmatpush1.msra.mxu0 0.0
  %674 = vmatprep.subr.mxu0 0.0
  %675 = vmatpush1.msra.mxu0 0.0
  %676 = vmatprep.subr.mxu0 0.0
  %677 = vmatpush1.msra.mxu0 0.0
  %678 = vmatprep.subr.mxu0 0.0
  %679 = vmatpush1.msra.mxu0 0.0
  %680 = vmatprep.subr.mxu0 0.0
  %681 = vmatpush1.msra.mxu0 0.0
  %682 = vmatprep.subr.mxu0 0.0
  %683 = vmatpush1.msra.mxu0 0.0
  %684 = vmatprep.subr.mxu0 0.0
  %685 = vmatpush1.msra.mxu0 0.0
  %686 = vmatprep.subr.mxu0 0.0
  %687 = vmatpush1.msra.mxu0 0.0
  %688 = vmatprep.subr.mxu0 0.0
  %689 = vmatpush1.msra.mxu0 0.0
  %690 = vmatprep.subr.mxu0 0.0
  %691 = vmatpush1.msra.mxu0 0.0
  %692 = vmatprep.subr.mxu0 0.0
  %693 = vmatpush1.msra.mxu0 0.0
  %694 = vmatprep.subr.mxu0 0.0
  %695 = vmatpush1.msra.mxu0 0.0
  %696 = vmatprep.subr.mxu0 0.0
  %697 = vmatpush1.msra.mxu0 0.0
  %698 = vmatprep.mubr.f32.mxu0 0.0
  %699 = vmatmul.mubr.f32.gmra.mrb[0].mxu0 %v587
  %v700 = vpop.f32.mrb[0].mxu0
  %v701 = vadd.f32 0.0, %v700
  %v702 = vpop.f32.mrb[0].mxu0
  %703 = vmatprep.mubr.f32.mxu0 0.0
  %704 = vmatmul.mubr.f32.gmra.mrb[0].mxu0 %v590
  %v705 = vpop.f32.mrb[0].mxu0
  %v706 = vadd.f32 0.0, %v705
  %v707 = vpop.f32.mrb[0].mxu0
  %708 = vmatprep.mubr.f32.mxu0 0.0
  %709 = vmatmul.mubr.f32.gmra.mrb[0].mxu0 %v593
  %v710 = vpop.f32.mrb[0].mxu0
  %v711 = vadd.f32 0.0, %v710
  %v712 = vpop.f32.mrb[0].mxu0
  %713 = vmatprep.mubr.f32.mxu0 0.0
  %714 = vmatmul.mubr.f32.gmra.mrb[0].mxu0 %v596
  %v715 = vpop.f32.mrb[0].mxu0
  %v716 = vadd.f32 0.0, %v715
  %v717 = vpop.f32.mrb[0].mxu0
  %718 = vmatprep.mubr.f32.mxu0 0.0
  %719 = vmatmul.mubr.f32.gmra.mrb[0].mxu0 %v599
  %v720 = vpop.f32.mrb[0].mxu0
  %v721 = vadd.f32 0.0, %v720
  %v722 = vpop.f32.mrb[0].mxu0
  %723 = vmatprep.mubr.f32.mxu0 0.0
  %724 = vmatmul.mubr.f32.gmra.mrb[0].mxu0 %v602
  %v725 = vpop.f32.mrb[0].mxu0
  %v726 = vadd.f32 0.0, %v725
  %v727 = vpop.f32.mrb[0].mxu0
  %728 = vmatprep.mubr.f32.mxu0 0.0
  %729 = vmatmul.mubr.f32.gmra.mrb[0].mxu0 %v605
  %v730 = vpop.f32.mrb[0].mxu0
  %v731 = vadd.f32 0.0, %v730
  %v732 = vpop.f32.mrb[0].mxu0
  %733 = vmatprep.mubr.f32.mxu0 0.0
  %734 = vmatmul.mubr.f32.gmra.mrb[0].mxu0 %v608
  %v735 = vpop.f32.mrb[0].mxu0
  %v736 = vadd.f32 0.0, %v735
  %v737 = vpop.f32.mrb[0].mxu0
  %738 = vmatprep.mubr.f32.mxu0 0.0
  %739 = vmatmul.mubr.f32.gmra.mrb[0].mxu0 %v611
  %v740 = vpop.f32.mrb[0].mxu0
  %v741 = vadd.f32 0.0, %v740
  %v742 = vpop.f32.mrb[0].mxu0
  %743 = vmatprep.mubr.f32.mxu0 0.0
  %744 = vmatmul.mubr.f32.gmra.mrb[0].mxu0 %v614
  %v745 = vpop.f32.mrb[0].mxu0
  %v746 = vadd.f32 0.0, %v745
  %v747 = vpop.f32.mrb[0].mxu0
  %748 = vmatprep.mubr.f32.mxu0 0.0
  %749 = vmatmul.mubr.f32.gmra.mrb[0].mxu0 %v617
  %v750 = vpop.f32.mrb[0].mxu0
  %v751 = vadd.f32 0.0, %v750
  %v752 = vpop.f32.mrb[0].mxu0
  %753 = vmatprep.mubr.f32.mxu0 0.0
  %754 = vmatmul.mubr.f32.gmra.mrb[0].mxu0 %v620
  %v755 = vpop.f32.mrb[0].mxu0
  %v756 = vadd.f32 0.0, %v755
  %v757 = vpop.f32.mrb[0].mxu0
  %758 = vmatprep.mubr.f32.mxu0 0.0
  %759 = vmatmul.mubr.f32.gmra.mrb[0].mxu0 %v623
  %v760 = vpop.f32.mrb[0].mxu0
  %v761 = vadd.f32 0.0, %v760
  %v762 = vpop.f32.mrb[0].mxu0
  %763 = vmatprep.mubr.f32.mxu0 0.0
  %764 = vmatmul.mubr.f32.gmra.mrb[0].mxu0 %v626
  %v765 = vpop.f32.mrb[0].mxu0
  %v766 = vadd.f32 0.0, %v765
  %v767 = vpop.f32.mrb[0].mxu0
  %768 = vmatprep.mubr.f32.mxu0 0.0
  %769 = vmatmul.mubr.f32.gmra.mrb[0].mxu0 %v629
  %v770 = vpop.f32.mrb[0].mxu0
  %v771 = vadd.f32 0.0, %v770
  %v772 = vpop.f32.mrb[0].mxu0
  %773 = vmatprep.mubr.f32.mxu0 0.0
  %774 = vmatmul.mubr.f32.gmra.mrb[0].mxu0 %v632
  %v775 = vpop.f32.mrb[0].mxu0
  %v776 = vadd.f32 0.0, %v775
  %v777 = vpop.f32.mrb[0].mxu0
  %778 = vdwg.mxu0
  %v779 = vmul.f32 %v249, %v701
  %v780 = vmul.f32 %v250, %v706
  %v781 = vmul.f32 %v251, %v711
  %v782 = vmul.f32 %v252, %v716
  %v783 = vmul.f32 %v253, %v721
  %v784 = vmul.f32 %v254, %v726
  %v785 = vmul.f32 %v255, %v731
  %v786 = vmul.f32 %v256, %v736
  %v787 = vmul.f32 %v257, %v741
  %v788 = vmul.f32 %v258, %v746
  %v789 = vmul.f32 %v259, %v751
  %v790 = vmul.f32 %v260, %v756
  %v791 = vmul.f32 %v261, %v761
  %v792 = vmul.f32 %v262, %v766
  %v793 = vmul.f32 %v263, %v771
  %v794 = vmul.f32 %v264, %v776
  %vm795 = vcmask 7168
  %796 = vst.msk [vmem:[%s6] sm:$0xff] %vm795, %v779
  %797 = vst.msk [vmem:[%s6 + $0x8] sm:$0xff] %vm795, %v780
  %798 = vst.msk [vmem:[%s6 + $0x10] sm:$0xff] %vm795, %v781
  %799 = vst.msk [vmem:[%s6 + $0x18] sm:$0xff] %vm795, %v782
  %800 = vst.msk [vmem:[%s6 + $0x20] sm:$0xff] %vm795, %v783
  %801 = vst.msk [vmem:[%s6 + $0x28] sm:$0xff] %vm795, %v784
  %802 = vst.msk [vmem:[%s6 + $0x30] sm:$0xff] %vm795, %v785
  %803 = vst.msk [vmem:[%s6 + $0x38] sm:$0xff] %vm795, %v786
  %804 = vst.msk [vmem:[%s6 + $0x40] sm:$0xff] %vm795, %v787
  %805 = vst.msk [vmem:[%s6 + $0x48] sm:$0xff] %vm795, %v788
  %806 = vst.msk [vmem:[%s6 + $0x50] sm:$0xff] %vm795, %v789
  %807 = vst.msk [vmem:[%s6 + $0x58] sm:$0xff] %vm795, %v790
  %808 = vst.msk [vmem:[%s6 + $0x60] sm:$0xff] %vm795, %v791
  %809 = vst.msk [vmem:[%s6 + $0x68] sm:$0xff] %vm795, %v792
  %810 = vst.msk [vmem:[%s6 + $0x70] sm:$0xff] %vm795, %v793
  %811 = vst.msk [vmem:[%s6 + $0x78] sm:$0xff] %vm795, %v794
  // Predicated region
  $region26: #{tpu_custom_call.1} parent=0 // pred_check
    _
  $region27: #{tpu_custom_call.1} parent=0 // pred_check_branch
    %813 = sbr.rel (0) target = $region29
  $region28: #{tpu_custom_call.1} parent=0 // pred_region
    _
  $region29: #{tpu_custom_call.1} parent=0 // pred_fallthru
    _
  // Predicated region
  $region30: #{tpu_custom_call.1} parent=0 // pred_check
    _
  $region31: #{tpu_custom_call.1} parent=0 // pred_check_branch
    %815 = sbr.rel (0) target = $region33
  $region32: #{tpu_custom_call.1} parent=0 // pred_region
    _
  $region33: #{tpu_custom_call.1} parent=0 // pred_fallthru
    _

</llo_original>
